<compile_context>
chip_gen: v7x
topology: tpu7x:2x2x1
jax: 0.10.0
libtpu: 0.0.40
codegen_flags: <defaults>
</compile_context>

<pallas_src>
import functools

import jax
import jax.numpy as jnp
import numpy as np
from jax import lax
from jax.experimental import pallas as pl
from jax.experimental.pallas import tpu as pltpu


def _make_mlp_critic_kernel(num_layers):
    """Kernel for a `num_layers`-Linear MLP: tanh on hidden layers, identity on
    the output layer.  Args: x_ref, (wT_ref, b_ref) * L, o_ref.  Weights are
    pre-transposed to (out, in); biases are (out, 1).  All math runs in the
    transposed orientation hT = (features, block_m) so vregs are lane-dense."""

    def kernel(x_ref, *refs):
        o_ref = refs[-1]
        wb = refs[:-1]

        hT = None
        for l in range(num_layers):
            wt = wb[2 * l][...]           # (out_l, in_l)
            b = wb[2 * l + 1][...]        # (out_l, 1)
            if l == 0:
                # Contract obs on its feature dim: (out, in) x (block_m, in)^T
                # -> (out, block_m).  No explicit transpose of the obs tile.
                zT = lax.dot_general(
                    wt, x_ref[...], (((1,), (1,)), ((), ())),
                    preferred_element_type=jnp.float32)
            else:
                zT = jnp.dot(wt, hT, preferred_element_type=jnp.float32)
            zT = zT + b                                   # f32 bias add (VPU)
            hT = jnp.tanh(zT) if l < num_layers - 1 else zT   # f32 tanh (EUP)

        # Final layer result is (1, block_m): lane-dense, unmasked stores.
        o_ref[...] = hT.astype(o_ref.dtype)

    return kernel


def _num_tensorcores():
    """Best-effort: 2 TensorCores per chip on v7x, 1 on v5e/v6e."""
    try:
        kind = jax.devices()[0].device_kind.lower()
        if "v7" in kind:
            return 2
    except Exception:
        pass
    return 1


def _choose_tiling(B, num_batch_tiles):
    """Pick (block_m, n_tiles).  Prefer a single full-batch tile (no padding,
    no wrapper passes); split only for megacore (v7x) or very large batches."""
    MAX_BLOCK_M = 2048  # still tiny in VMEM (obs tile + hT slabs << 1 MiB)
    if num_batch_tiles is None:
        num_batch_tiles = _num_tensorcores() if B >= 256 else 1
    num_batch_tiles = max(num_batch_tiles, -(-B // MAX_BLOCK_M))
    if num_batch_tiles <= 1:
        return B, 1                       # full-array block: no constraints
    per_tile = -(-B // num_batch_tiles)
    block_m = max(128, ((per_tile + 127) // 128) * 128)   # 128-lane-dense out
    n_tiles = -(-B // block_m)
    return block_m, n_tiles


@functools.partial(jax.jit, static_argnames=("num_batch_tiles",))
def mlp_critic_forward(obs, params, *, num_batch_tiles=None):
    """obs: (B, obs_dim) float32.  params: (w1, b1, ..., wL, bL) with weights
    stored (in, out) and biases stored (out,) (PyTorch layout).
    Returns value estimates (B,) float32."""
    num_layers = len(params) // 2
    assert len(params) == 2 * num_layers and num_layers >= 1
    B, obs_dim = obs.shape

    block_m, n_tiles = _choose_tiling(B, num_batch_tiles)
    B_pad = block_m * n_tiles
    # Default path: B_pad == B -> no wrapper pad/astype pass over obs at all.
    x = obs if B_pad == B else jnp.pad(obs, ((0, B_pad - B), (0, 0)))

    # Tiny per-layer reshapes so the kernel runs transposed: W -> W^T (out,in),
    # b -> (out,1).  These touch a few KiB of weights, nothing batch-scaling.
    flat = []
    for l in range(num_layers):
        w, b = params[2 * l], params[2 * l + 1]
        flat += [jnp.transpose(w), jnp.reshape(b, (-1, 1))]

    resident = lambda i: (0, 0)  # weights/biases resident across the batch grid
    in_specs = [pl.BlockSpec((block_m, obs_dim), lambda i: (i, 0))]  # obs tile
    for a in flat:
        in_specs.append(pl.BlockSpec(a.shape, resident))

    out = pl.pallas_call(
        _make_mlp_critic_kernel(num_layers),
        out_shape=jax.ShapeDtypeStruct((1, B_pad), jnp.float32),
        grid_spec=pltpu.PrefetchScalarGridSpec(
            num_scalar_prefetch=0,
            grid=(n_tiles,),
            in_specs=in_specs,
            out_specs=pl.BlockSpec((1, block_m), lambda i: (0, i)),
        ),
        compiler_params=pltpu.CompilerParams(
            dimension_semantics=("parallel",)),  # batch tiles shard on v7x
    )(x, *flat)

    # torch.squeeze(v, -1): free reshape (+ tail slice only if we padded).
    return out.reshape(B_pad)[:B]


def init_params(key, obs_dim, hidden_sizes):
    """Deterministic init mimicking torch.nn.Linear's default U(-1/sqrt(fan_in)).
    Weights stored (in, out); biases stored (out,) (PyTorch layout)."""
    sizes = [obs_dim] + list(hidden_sizes) + [1]
    params = []
    for j in range(len(sizes) - 1):
        key, kw, kb = jax.random.split(key, 3)
        bound = 1.0 / np.sqrt(sizes[j])
        w = jax.random.uniform(kw, (sizes[j], sizes[j + 1]), jnp.float32,
                               -bound, bound)
        b = jax.random.uniform(kb, (sizes[j + 1],), jnp.float32, -bound, bound)
        params += [w, b]
    return tuple(params)


def mlp_critic_reference(obs, params):
    num_layers = len(params) // 2
    h = obs
    for l in range(num_layers - 1):
        h = jnp.tanh(h @ params[2 * l] + params[2 * l + 1])
    v = h @ params[-2] + params[-1]
    return jnp.squeeze(v, -1)


if __name__ == "__main__":
    key = jax.random.PRNGKey(0)
    k_obs, k_params = jax.random.split(key)

    batch = 300            # non-multiple of 128 -> exercises full-batch tiling
    obs_dim = 32
    hidden_sizes = (64, 64)

    obs = jax.random.normal(k_obs, (batch, obs_dim), dtype=jnp.float32)
    params = init_params(k_params, obs_dim, hidden_sizes)

    v = mlp_critic_forward(obs, params)
    v = jax.block_until_ready(v)

    v_ref = mlp_critic_reference(obs, params)
    assert v.shape == (batch,)
    # f32 weights/activations; only MXU default-precision rounding differs.
    np.testing.assert_allclose(np.asarray(v), np.asarray(v_ref),
                               rtol=2e-2, atol=2e-2)
    print("KERNEL_OK")
</pallas_src>

<mosaic_0001>
module attributes {stable_mosaic.version = 11 : i64} {
  func.func @kernel(%arg0: i32, %arg1: memref<300x32xf32, #tpu.memory_space<vmem>>, %arg2: memref<64x32xf32, #tpu.memory_space<vmem>>, %arg3: memref<64x1xf32, #tpu.memory_space<vmem>>, %arg4: memref<64x64xf32, #tpu.memory_space<vmem>>, %arg5: memref<64x1xf32, #tpu.memory_space<vmem>>, %arg6: memref<1x64xf32, #tpu.memory_space<vmem>>, %arg7: memref<1x1xf32, #tpu.memory_space<vmem>>, %arg8: memref<1x300xf32, #tpu.memory_space<vmem>>) attributes {dimension_semantics = [#tpu.dimension_semantics<parallel>], iteration_bounds = array<i64: 1>, scalar_prefetch = 0 : i64, scratch_operands = 0 : i64, tpu.core_type = #tpu.core_type<tc>, window_params = [{transform_indices = @transform_0, window_bounds = array<i64: 300, 32>}, {pipeline_mode = #tpu.pipeline_mode<synchronous>, transform_indices = @transform_1, window_bounds = array<i64: 64, 32>}, {pipeline_mode = #tpu.pipeline_mode<synchronous>, transform_indices = @transform_2, window_bounds = array<i64: 64, 1>}, {pipeline_mode = #tpu.pipeline_mode<synchronous>, transform_indices = @transform_3, window_bounds = array<i64: 64, 64>}, {pipeline_mode = #tpu.pipeline_mode<synchronous>, transform_indices = @transform_4, window_bounds = array<i64: 64, 1>}, {pipeline_mode = #tpu.pipeline_mode<synchronous>, transform_indices = @transform_5, window_bounds = array<i64: 1, 64>}, {pipeline_mode = #tpu.pipeline_mode<synchronous>, transform_indices = @transform_6, window_bounds = array<i64: 1, 1>}, {transform_indices = @transform_7, window_bounds = array<i64: 1, 300>}]} {
    %c0 = arith.constant 0 : index
    %c0_0 = arith.constant 0 : index
    %0 = vector.load %arg2[%c0, %c0_0] : memref<64x32xf32, #tpu.memory_space<vmem>>, vector<64x32xf32>
    %c0_1 = arith.constant 0 : index
    %c0_2 = arith.constant 0 : index
    %1 = vector.load %arg3[%c0_1, %c0_2] : memref<64x1xf32, #tpu.memory_space<vmem>>, vector<64x1xf32>
    %c0_3 = arith.constant 0 : index
    %c0_4 = arith.constant 0 : index
    %2 = vector.load %arg1[%c0_3, %c0_4] : memref<300x32xf32, #tpu.memory_space<vmem>>, vector<300x32xf32>
    %cst = arith.constant dense<0.000000e+00> : vector<64x300xf32>
    %3 = tpu.matmul %0, %2, %cst {dimension_numbers = #tpu.dot_dimension_numbers<[1], [1], [0], [0], [0, 0, 1, 0], [], []>} : vector<64x32xf32>, vector<300x32xf32>, vector<64x300xf32> -> vector<64x300xf32>
    %4 = vector.broadcast %1 : vector<64x1xf32> to vector<64x300xf32>
    %5 = arith.addf %3, %4 : vector<64x300xf32>
    %6 = math.tanh %5 : vector<64x300xf32>
    %c0_5 = arith.constant 0 : index
    %c0_6 = arith.constant 0 : index
    %7 = vector.load %arg4[%c0_5, %c0_6] : memref<64x64xf32, #tpu.memory_space<vmem>>, vector<64x64xf32>
    %c0_7 = arith.constant 0 : index
    %c0_8 = arith.constant 0 : index
    %8 = vector.load %arg5[%c0_7, %c0_8] : memref<64x1xf32, #tpu.memory_space<vmem>>, vector<64x1xf32>
    %cst_9 = arith.constant dense<0.000000e+00> : vector<64x300xf32>
    %9 = tpu.matmul %7, %6, %cst_9 {dimension_numbers = #tpu.dot_dimension_numbers<[1], [0], [0], [1], [0, 0, 1, 1], [], []>} : vector<64x64xf32>, vector<64x300xf32>, vector<64x300xf32> -> vector<64x300xf32>
    %10 = vector.broadcast %8 : vector<64x1xf32> to vector<64x300xf32>
    %11 = arith.addf %9, %10 : vector<64x300xf32>
    %12 = math.tanh %11 : vector<64x300xf32>
    %c0_10 = arith.constant 0 : index
    %c0_11 = arith.constant 0 : index
    %13 = vector.load %arg6[%c0_10, %c0_11] : memref<1x64xf32, #tpu.memory_space<vmem>>, vector<1x64xf32>
    %c0_12 = arith.constant 0 : index
    %c0_13 = arith.constant 0 : index
    %14 = vector.load %arg7[%c0_12, %c0_13] : memref<1x1xf32, #tpu.memory_space<vmem>>, vector<1x1xf32>
    %cst_14 = arith.constant dense<0.000000e+00> : vector<1x300xf32>
    %15 = tpu.matmul %13, %12, %cst_14 {dimension_numbers = #tpu.dot_dimension_numbers<[1], [0], [0], [1], [0, 0, 1, 1], [], []>} : vector<1x64xf32>, vector<64x300xf32>, vector<1x300xf32> -> vector<1x300xf32>
    %16 = vector.broadcast %14 : vector<1x1xf32> to vector<1x300xf32>
    %17 = arith.addf %15, %16 : vector<1x300xf32>
    %c0_15 = arith.constant 0 : index
    %c0_16 = arith.constant 0 : index
    %18 = vector.load %arg8[%c0_15, %c0_16] : memref<1x300xf32, #tpu.memory_space<vmem>>, vector<1x300xf32>
    tpu.vector_store %arg8[%c0_15, %c0_16], %17 {strides = array<i32>} : memref<1x300xf32, #tpu.memory_space<vmem>>, vector<1x300xf32>,
    return
  }
  func.func @transform_0(%arg0: i32) -> (i32, i32) {
    %c0_i32 = arith.constant 0 : i32
    %c0_i32_0 = arith.constant 0 : i32
    return %arg0, %c0_i32 : i32, i32
  }
  func.func @transform_1(%arg0: i32) -> (i32, i32) {
    %c0_i32 = arith.constant 0 : i32
    %c0_i32_0 = arith.constant 0 : i32
    %c0_i32_1 = arith.constant 0 : i32
    return %c0_i32, %c0_i32_0 : i32, i32
  }
  func.func @transform_2(%arg0: i32) -> (i32, i32) {
    %c0_i32 = arith.constant 0 : i32
    %c0_i32_0 = arith.constant 0 : i32
    %c0_i32_1 = arith.constant 0 : i32
    return %c0_i32, %c0_i32_0 : i32, i32
  }
  func.func @transform_3(%arg0: i32) -> (i32, i32) {
    %c0_i32 = arith.constant 0 : i32
    %c0_i32_0 = arith.constant 0 : i32
    %c0_i32_1 = arith.constant 0 : i32
    return %c0_i32, %c0_i32_0 : i32, i32
  }
  func.func @transform_4(%arg0: i32) -> (i32, i32) {
    %c0_i32 = arith.constant 0 : i32
    %c0_i32_0 = arith.constant 0 : i32
    %c0_i32_1 = arith.constant 0 : i32
    return %c0_i32, %c0_i32_0 : i32, i32
  }
  func.func @transform_5(%arg0: i32) -> (i32, i32) {
    %c0_i32 = arith.constant 0 : i32
    %c0_i32_0 = arith.constant 0 : i32
    %c0_i32_1 = arith.constant 0 : i32
    return %c0_i32, %c0_i32_0 : i32, i32
  }
  func.func @transform_6(%arg0: i32) -> (i32, i32) {
    %c0_i32 = arith.constant 0 : i32
    %c0_i32_0 = arith.constant 0 : i32
    %c0_i32_1 = arith.constant 0 : i32
    return %c0_i32, %c0_i32_0 : i32, i32
  }
  func.func @transform_7(%arg0: i32) -> (i32, i32) {
    %c0_i32 = arith.constant 0 : i32
    %c0_i32_0 = arith.constant 0 : i32
    return %c0_i32, %arg0 : i32, i32
  }
}

</mosaic_0001>

<llo_original>
// kernel: mlp_critic_forward.1
$region0: #{mlp_critic_forward.1}
  #allocation0 [shape = 'u32[]', space=smem, size = 0x4, offset = 0x4, fixed_abs, tag = 'smem constant byte address 0x4 - core index']
  #allocation1 [shape = 'u32[144,128]{1,0:T(1,128)}', space=vmem, size = 0x12000, scoped, tag = 'internal scratch']
  #allocation2 [shape = 'f32[1,1]{1,0:T(1,128)S(1)}', space=vmem, size = 0x200, scoped, tag = 'scoped memory for mlp_critic_forward.1']
  %s0 = inlined_call_operand.vmem [shape: f32[300,32], index: 0, kind: input, shape index: {}]
  %s1 = inlined_call_operand.vmem [shape: f32[64,32], index: 1, kind: input, shape index: {}]
  %s2 = inlined_call_operand.vmem [shape: f32[64,1], index: 2, kind: input, shape index: {}]
  %s3 = inlined_call_operand.vmem [shape: f32[64,64], index: 3, kind: input, shape index: {}]
  %s4 = inlined_call_operand.vmem [shape: f32[64,1], index: 4, kind: input, shape index: {}]
  %s5 = inlined_call_operand.vmem [shape: f32[1,64], index: 5, kind: input, shape index: {}]
  %s6 = inlined_call_operand.<no memory space> [shape: f32[1,1], index: 6, kind: input, shape index: {}]
  %s7 = inlined_call_operand.vmem [shape: f32[1,300], index: 7, kind: output, shape index: {}]
  %s8 = sld [smem:[#allocation0]]
  $region38: #{mlp_critic_forward.1} parent=0
    _
  %s10 = ssub.s32 1, %s8
  %s11 = scalar_select 0, %s10, %s8
  %v12 = vstv %s6
  %13 = vst [vmem:[#allocation2] sm:$0x1] %v12
  // Predicated region
  $region2: #{mlp_critic_forward.1} parent=0 // pred_check
    _
  $region3: #{mlp_critic_forward.1} parent=0 // pred_check_branch
    %15 = sbr.rel (0) target = $region5
  $region4: #{mlp_critic_forward.1} parent=0 // pred_region
    _
  $region5: #{mlp_critic_forward.1} parent=0 // pred_fallthru
    _
  // Predicated region
  $region6: #{mlp_critic_forward.1} parent=0 // pred_check
    _
  $region7: #{mlp_critic_forward.1} parent=0 // pred_check_branch
    %17 = sbr.rel (0) target = $region9
  $region8: #{mlp_critic_forward.1} parent=0 // pred_region
    _
  $region9: #{mlp_critic_forward.1} parent=0 // pred_fallthru
    _
  // Predicated region
  $region10: #{mlp_critic_forward.1} parent=0 // pred_check
    _
  $region11: #{mlp_critic_forward.1} parent=0 // pred_check_branch
    %19 = sbr.rel (0) target = $region13
  $region12: #{mlp_critic_forward.1} parent=0 // pred_region
    _
  $region13: #{mlp_critic_forward.1} parent=0 // pred_fallthru
    _
  // Predicated region
  $region14: #{mlp_critic_forward.1} parent=0 // pred_check
    _
  $region15: #{mlp_critic_forward.1} parent=0 // pred_check_branch
    %21 = sbr.rel (0) target = $region17
  $region16: #{mlp_critic_forward.1} parent=0 // pred_region
    _
  $region17: #{mlp_critic_forward.1} parent=0 // pred_fallthru
    _
  // Predicated region
  $region18: #{mlp_critic_forward.1} parent=0 // pred_check
    _
  $region19: #{mlp_critic_forward.1} parent=0 // pred_check_branch
    %23 = sbr.rel (0) target = $region21
  $region20: #{mlp_critic_forward.1} parent=0 // pred_region
    _
  $region21: #{mlp_critic_forward.1} parent=0 // pred_fallthru
    _
  // Predicated region
  $region22: #{mlp_critic_forward.1} parent=0 // pred_check
    _
  $region23: #{mlp_critic_forward.1} parent=0 // pred_check_branch
    %25 = sbr.rel (0) target = $region25
  $region24: #{mlp_critic_forward.1} parent=0 // pred_region
    _
  $region25: #{mlp_critic_forward.1} parent=0 // pred_fallthru
    _
  // Predicated region
  $region26: #{mlp_critic_forward.1} parent=0 // pred_check
    _
  $region27: #{mlp_critic_forward.1} parent=0 // pred_check_branch
    %27 = sbr.rel (0) target = $region29
  $region28: #{mlp_critic_forward.1} parent=0 // pred_region
    _
  $region29: #{mlp_critic_forward.1} parent=0 // pred_fallthru
    _
  %v28 = vld [vmem:[%s1] sm:$0xff]
  %v29 = vld [vmem:[%s1 + $0x8] sm:$0xff]
  %v30 = vld [vmem:[%s1 + $0x10] sm:$0xff]
  %v31 = vld [vmem:[%s1 + $0x18] sm:$0xff]
  %v32 = vld [vmem:[%s1 + $0x20] sm:$0xff]
  %v33 = vld [vmem:[%s1 + $0x28] sm:$0xff]
  %v34 = vld [vmem:[%s1 + $0x30] sm:$0xff]
  %v35 = vld [vmem:[%s1 + $0x38] sm:$0xff]
  %v36 = vld [vmem:[%s2] sm:$0xff]
  %v37 = vld [vmem:[%s2 + $0x8] sm:$0xff]
  %v38 = vld [vmem:[%s2 + $0x10] sm:$0xff]
  %v39 = vld [vmem:[%s2 + $0x18] sm:$0xff]
  %v40 = vld [vmem:[%s2 + $0x20] sm:$0xff]
  %v41 = vld [vmem:[%s2 + $0x28] sm:$0xff]
  %v42 = vld [vmem:[%s2 + $0x30] sm:$0xff]
  %v43 = vld [vmem:[%s2 + $0x38] sm:$0xff]
  %v44 = vld [vmem:[%s0] sm:$0xff]
  %v45 = vld [vmem:[%s0 + $0x8] sm:$0xff]
  %v46 = vld [vmem:[%s0 + $0x10] sm:$0xff]
  %v47 = vld [vmem:[%s0 + $0x18] sm:$0xff]
  %v48 = vld [vmem:[%s0 + $0x20] sm:$0xff]
  %v49 = vld [vmem:[%s0 + $0x28] sm:$0xff]
  %v50 = vld [vmem:[%s0 + $0x30] sm:$0xff]
  %v51 = vld [vmem:[%s0 + $0x38] sm:$0xff]
  %v52 = vld [vmem:[%s0 + $0x40] sm:$0xff]
  %v53 = vld [vmem:[%s0 + $0x48] sm:$0xff]
  %v54 = vld [vmem:[%s0 + $0x50] sm:$0xff]
  %v55 = vld [vmem:[%s0 + $0x58] sm:$0xff]
  %v56 = vld [vmem:[%s0 + $0x60] sm:$0xff]
  %v57 = vld [vmem:[%s0 + $0x68] sm:$0xff]
  %v58 = vld [vmem:[%s0 + $0x70] sm:$0xff]
  %v59 = vld [vmem:[%s0 + $0x78] sm:$0xff]
  %v60 = vld [vmem:[%s0 + $0x80] sm:$0xff]
  %v61 = vld [vmem:[%s0 + $0x88] sm:$0xff]
  %v62 = vld [vmem:[%s0 + $0x90] sm:$0xff]
  %v63 = vld [vmem:[%s0 + $0x98] sm:$0xff]
  %v64 = vld [vmem:[%s0 + $0xa0] sm:$0xff]
  %v65 = vld [vmem:[%s0 + $0xa8] sm:$0xff]
  %v66 = vld [vmem:[%s0 + $0xb0] sm:$0xff]
  %v67 = vld [vmem:[%s0 + $0xb8] sm:$0xff]
  %v68 = vld [vmem:[%s0 + $0xc0] sm:$0xff]
  %v69 = vld [vmem:[%s0 + $0xc8] sm:$0xff]
  %v70 = vld [vmem:[%s0 + $0xd0] sm:$0xff]
  %v71 = vld [vmem:[%s0 + $0xd8] sm:$0xff]
  %v72 = vld [vmem:[%s0 + $0xe0] sm:$0xff]
  %v73 = vld [vmem:[%s0 + $0xe8] sm:$0xff]
  %v74 = vld [vmem:[%s0 + $0xf0] sm:$0xff]
  %v75 = vld [vmem:[%s0 + $0xf8] sm:$0xff]
  %v76 = vld [vmem:[%s0 + $0x100] sm:$0xff]
  %v77 = vld [vmem:[%s0 + $0x108] sm:$0xff]
  %v78 = vld [vmem:[%s0 + $0x110] sm:$0xff]
  %v79 = vld [vmem:[%s0 + $0x118] sm:$0xff]
  %v80 = vld [vmem:[%s0 + $0x120] sm:$0xff]
  %v81 = vld [vmem:[%s0 + $0x128] sm:$0xf]
  %83 = vset.pattern.permute.xlu0 0
  %84 = vperm.xlu0 %83, %v36
  %v85 = vpop.permute.xlu0 %84
  %88 = vset.pattern.permute.xlu0 0
  %89 = vperm.xlu0 %88, %v37
  %v90 = vpop.permute.xlu0 %89
  %93 = vset.pattern.permute.xlu0 0
  %94 = vperm.xlu0 %93, %v38
  %v95 = vpop.permute.xlu0 %94
  %98 = vset.pattern.permute.xlu0 0
  %99 = vperm.xlu0 %98, %v39
  %v100 = vpop.permute.xlu0 %99
  %103 = vset.pattern.permute.xlu0 0
  %104 = vperm.xlu0 %103, %v40
  %v105 = vpop.permute.xlu0 %104
  %108 = vset.pattern.permute.xlu0 0
  %109 = vperm.xlu0 %108, %v41
  %v110 = vpop.permute.xlu0 %109
  %113 = vset.pattern.permute.xlu0 0
  %114 = vperm.xlu0 %113, %v42
  %v115 = vpop.permute.xlu0 %114
  %118 = vset.pattern.permute.xlu0 0
  %119 = vperm.xlu0 %118, %v43
  %v120 = vpop.permute.xlu0 %119
  %vm122 = vcmask 261120
  %v124 = vsel %vm122, %v28, 0
  %v127 = vsel %vm122, %v29, 0
  %v130 = vsel %vm122, %v30, 0
  %v133 = vsel %vm122, %v31, 0
  %v136 = vsel %vm122, %v32, 0
  %v139 = vsel %vm122, %v33, 0
  %v142 = vsel %vm122, %v34, 0
  %v145 = vsel %vm122, %v35, 0
  %v148 = vsel %vm122, %v44, 0
  %v151 = vsel %vm122, %v45, 0
  %v154 = vsel %vm122, %v46, 0
  %v157 = vsel %vm122, %v47, 0
  %v160 = vsel %vm122, %v48, 0
  %v163 = vsel %vm122, %v49, 0
  %v166 = vsel %vm122, %v50, 0
  %v169 = vsel %vm122, %v51, 0
  %v172 = vsel %vm122, %v52, 0
  %v175 = vsel %vm122, %v53, 0
  %v178 = vsel %vm122, %v54, 0
  %v181 = vsel %vm122, %v55, 0
  %v184 = vsel %vm122, %v56, 0
  %v187 = vsel %vm122, %v57, 0
  %v190 = vsel %vm122, %v58, 0
  %v193 = vsel %vm122, %v59, 0
  %v196 = vsel %vm122, %v60, 0
  %v199 = vsel %vm122, %v61, 0
  %v202 = vsel %vm122, %v62, 0
  %v205 = vsel %vm122, %v63, 0
  %v208 = vsel %vm122, %v64, 0
  %v211 = vsel %vm122, %v65, 0
  %v214 = vsel %vm122, %v66, 0
  %v217 = vsel %vm122, %v67, 0
  %v220 = vsel %vm122, %v68, 0
  %v223 = vsel %vm122, %v69, 0
  %v226 = vsel %vm122, %v70, 0
  %v229 = vsel %vm122, %v71, 0
  %v232 = vsel %vm122, %v72, 0
  %v235 = vsel %vm122, %v73, 0
  %v238 = vsel %vm122, %v74, 0
  %v241 = vsel %vm122, %v75, 0
  %v244 = vsel %vm122, %v76, 0
  %v247 = vsel %vm122, %v77, 0
  %v250 = vsel %vm122, %v78, 0
  %v253 = vsel %vm122, %v79, 0
  %v256 = vsel %vm122, %v80, 0
  %v259 = vsel %vm122, %v81, 0
  %261 = vmatprep.subr.mxu0 0.0
  %262 = vmatpush1.xpose.msra.mxu0 %v148
  %263 = vmatprep.subr.mxu0 0.0
  %264 = vmatpush1.xpose.msra.mxu0 %v151
  %265 = vmatprep.subr.mxu0 0.0
  %266 = vmatpush1.xpose.msra.mxu0 %v154
  %267 = vmatprep.subr.mxu0 0.0
  %268 = vmatpush1.xpose.msra.mxu0 %v157
  %269 = vmatprep.subr.mxu0 0.0
  %270 = vmatpush1.xpose.msra.mxu0 %v160
  %271 = vmatprep.subr.mxu0 0.0
  %272 = vmatpush1.xpose.msra.mxu0 %v163
  %273 = vmatprep.subr.mxu0 0.0
  %274 = vmatpush1.xpose.msra.mxu0 %v166
  %275 = vmatprep.subr.mxu0 0.0
  %276 = vmatpush1.xpose.msra.mxu0 %v169
  %277 = vmatprep.subr.mxu0 0.0
  %278 = vmatpush1.xpose.msra.mxu0 %v172
  %279 = vmatprep.subr.mxu0 0.0
  %280 = vmatpush1.xpose.msra.mxu0 %v175
  %281 = vmatprep.subr.mxu0 0.0
  %282 = vmatpush1.xpose.msra.mxu0 %v178
  %283 = vmatprep.subr.mxu0 0.0
  %284 = vmatpush1.xpose.msra.mxu0 %v181
  %285 = vmatprep.subr.mxu0 0.0
  %286 = vmatpush1.xpose.msra.mxu0 %v184
  %287 = vmatprep.subr.mxu0 0.0
  %288 = vmatpush1.xpose.msra.mxu0 %v187
  %289 = vmatprep.subr.mxu0 0.0
  %290 = vmatpush1.xpose.msra.mxu0 %v190
  %291 = vmatprep.subr.mxu0 0.0
  %292 = vmatpush1.xpose.msra.mxu0 %v193
  %293 = vmatprep.subr.mxu0 0.0
  %294 = vmatpush1.xpose.msra.mxu0 %v196
  %295 = vmatprep.subr.mxu0 0.0
  %296 = vmatpush1.xpose.msra.mxu0 %v199
  %297 = vmatprep.subr.mxu0 0.0
  %298 = vmatpush1.xpose.msra.mxu0 %v202
  %299 = vmatprep.subr.mxu0 0.0
  %300 = vmatpush1.xpose.msra.mxu0 %v205
  %301 = vmatprep.subr.mxu0 0.0
  %302 = vmatpush1.xpose.msra.mxu0 %v208
  %303 = vmatprep.subr.mxu0 0.0
  %304 = vmatpush1.xpose.msra.mxu0 %v211
  %305 = vmatprep.subr.mxu0 0.0
  %306 = vmatpush1.xpose.msra.mxu0 %v214
  %307 = vmatprep.subr.mxu0 0.0
  %308 = vmatpush1.xpose.msra.mxu0 %v217
  %309 = vmatprep.subr.mxu0 0.0
  %310 = vmatpush1.xpose.msra.mxu0 %v220
  %311 = vmatprep.subr.mxu0 0.0
  %312 = vmatpush1.xpose.msra.mxu0 %v223
  %313 = vmatprep.subr.mxu0 0.0
  %314 = vmatpush1.xpose.msra.mxu0 %v226
  %315 = vmatprep.subr.mxu0 0.0
  %316 = vmatpush1.xpose.msra.mxu0 %v229
  %317 = vmatprep.subr.mxu0 0.0
  %318 = vmatpush1.xpose.msra.mxu0 %v232
  %319 = vmatprep.subr.mxu0 0.0
  %320 = vmatpush1.xpose.msra.mxu0 %v235
  %321 = vmatprep.subr.mxu0 0.0
  %322 = vmatpush1.xpose.msra.mxu0 %v238
  %323 = vmatprep.subr.mxu0 0.0
  %324 = vmatpush1.xpose.msra.mxu0 %v241
  %325 = vmatprep.mubr.f32.mxu0 0.0
  %326 = vmatmul.mubr.f32.gmra.mrb[0].mxu0 %v124
  %v327 = vpop.f32.mrb[0].mxu0
  %v328 = vadd.f32 %v85, %v327
  %v329 = vpop.f32.mrb[0].mxu0
  %v330 = vadd.f32 %v85, %v329
  %331 = vmatprep.mubr.f32.mxu0 0.0
  %332 = vmatmul.mubr.f32.gmra.mrb[0].mxu0 %v127
  %v333 = vpop.f32.mrb[0].mxu0
  %v334 = vadd.f32 %v90, %v333
  %v335 = vpop.f32.mrb[0].mxu0
  %v336 = vadd.f32 %v90, %v335
  %337 = vmatprep.mubr.f32.mxu0 0.0
  %338 = vmatmul.mubr.f32.gmra.mrb[0].mxu0 %v130
  %v339 = vpop.f32.mrb[0].mxu0
  %v340 = vadd.f32 %v95, %v339
  %v341 = vpop.f32.mrb[0].mxu0
  %v342 = vadd.f32 %v95, %v341
  %343 = vmatprep.mubr.f32.mxu0 0.0
  %344 = vmatmul.mubr.f32.gmra.mrb[0].mxu0 %v133
  %v345 = vpop.f32.mrb[0].mxu0
  %v346 = vadd.f32 %v100, %v345
  %v347 = vpop.f32.mrb[0].mxu0
  %v348 = vadd.f32 %v100, %v347
  %349 = vmatprep.mubr.f32.mxu0 0.0
  %350 = vmatmul.mubr.f32.gmra.mrb[0].mxu0 %v136
  %v351 = vpop.f32.mrb[0].mxu0
  %v352 = vadd.f32 %v105, %v351
  %v353 = vpop.f32.mrb[0].mxu0
  %v354 = vadd.f32 %v105, %v353
  %355 = vmatprep.mubr.f32.mxu0 0.0
  %356 = vmatmul.mubr.f32.gmra.mrb[0].mxu0 %v139
  %v357 = vpop.f32.mrb[0].mxu0
  %v358 = vadd.f32 %v110, %v357
  %v359 = vpop.f32.mrb[0].mxu0
  %v360 = vadd.f32 %v110, %v359
  %361 = vmatprep.mubr.f32.mxu0 0.0
  %362 = vmatmul.mubr.f32.gmra.mrb[0].mxu0 %v142
  %v363 = vpop.f32.mrb[0].mxu0
  %v364 = vadd.f32 %v115, %v363
  %v365 = vpop.f32.mrb[0].mxu0
  %v366 = vadd.f32 %v115, %v365
  %367 = vmatprep.mubr.f32.mxu0 0.0
  %368 = vmatmul.mubr.f32.gmra.mrb[0].mxu0 %v145
  %v369 = vpop.f32.mrb[0].mxu0
  %v370 = vadd.f32 %v120, %v369
  %v371 = vpop.f32.mrb[0].mxu0
  %v372 = vadd.f32 %v120, %v371
  %373 = vdwg.mxu0
  %374 = vmatprep.subr.mxu0 0.0
  %375 = vmatpush1.xpose.msra.mxu0 %v244
  %376 = vmatprep.subr.mxu0 0.0
  %377 = vmatpush1.xpose.msra.mxu0 %v247
  %378 = vmatprep.subr.mxu0 0.0
  %379 = vmatpush1.xpose.msra.mxu0 %v250
  %380 = vmatprep.subr.mxu0 0.0
  %381 = vmatpush1.xpose.msra.mxu0 %v253
  %382 = vmatprep.subr.mxu0 0.0
  %383 = vmatpush1.xpose.msra.mxu0 %v256
  %384 = vmatprep.subr.mxu0 0.0
  %385 = vmatpush1.xpose.msra.mxu0 %v259
  %386 = vmatprep.subr.mxu0 0.0
  %387 = vmatpush1.xpose.msra.mxu0 0.0
  %388 = vmatprep.subr.mxu0 0.0
  %389 = vmatpush1.xpose.msra.mxu0 0.0
  %390 = vmatprep.subr.mxu0 0.0
  %391 = vmatpush1.xpose.msra.mxu0 0.0
  %392 = vmatprep.subr.mxu0 0.0
  %393 = vmatpush1.xpose.msra.mxu0 0.0
  %394 = vmatprep.subr.mxu0 0.0
  %395 = vmatpush1.xpose.msra.mxu0 0.0
  %396 = vmatprep.subr.mxu0 0.0
  %397 = vmatpush1.xpose.msra.mxu0 0.0
  %398 = vmatprep.subr.mxu0 0.0
  %399 = vmatpush1.xpose.msra.mxu0 0.0
  %400 = vmatprep.subr.mxu0 0.0
  %401 = vmatpush1.xpose.msra.mxu0 0.0
  %402 = vmatprep.subr.mxu0 0.0
  %403 = vmatpush1.xpose.msra.mxu0 0.0
  %404 = vmatprep.subr.mxu0 0.0
  %405 = vmatpush1.xpose.msra.mxu0 0.0
  %406 = vmatprep.subr.mxu0 0.0
  %407 = vmatpush1.xpose.msra.mxu0 0.0
  %408 = vmatprep.subr.mxu0 0.0
  %409 = vmatpush1.xpose.msra.mxu0 0.0
  %410 = vmatprep.subr.mxu0 0.0
  %411 = vmatpush1.xpose.msra.mxu0 0.0
  %412 = vmatprep.subr.mxu0 0.0
  %413 = vmatpush1.xpose.msra.mxu0 0.0
  %414 = vmatprep.subr.mxu0 0.0
  %415 = vmatpush1.xpose.msra.mxu0 0.0
  %416 = vmatprep.subr.mxu0 0.0
  %417 = vmatpush1.xpose.msra.mxu0 0.0
  %418 = vmatprep.subr.mxu0 0.0
  %419 = vmatpush1.xpose.msra.mxu0 0.0
  %420 = vmatprep.subr.mxu0 0.0
  %421 = vmatpush1.xpose.msra.mxu0 0.0
  %422 = vmatprep.subr.mxu0 0.0
  %423 = vmatpush1.xpose.msra.mxu0 0.0
  %424 = vmatprep.subr.mxu0 0.0
  %425 = vmatpush1.xpose.msra.mxu0 0.0
  %426 = vmatprep.subr.mxu0 0.0
  %427 = vmatpush1.xpose.msra.mxu0 0.0
  %428 = vmatprep.subr.mxu0 0.0
  %429 = vmatpush1.xpose.msra.mxu0 0.0
  %430 = vmatprep.subr.mxu0 0.0
  %431 = vmatpush1.xpose.msra.mxu0 0.0
  %432 = vmatprep.subr.mxu0 0.0
  %433 = vmatpush1.xpose.msra.mxu0 0.0
  %434 = vmatprep.subr.mxu0 0.0
  %435 = vmatpush1.xpose.msra.mxu0 0.0
  %436 = vmatprep.subr.mxu0 0.0
  %437 = vmatpush1.xpose.msra.mxu0 0.0
  %438 = vmatprep.mubr.f32.mxu0 0.0
  %439 = vmatmul.mubr.f32.gmra.mrb[0].mxu0 %v124
  %v440 = vpop.f32.mrb[0].mxu0
  %v441 = vadd.f32 %v85, %v440
  %v442 = vpop.f32.mrb[0].mxu0
  %443 = vmatprep.mubr.f32.mxu0 0.0
  %444 = vmatmul.mubr.f32.gmra.mrb[0].mxu0 %v127
  %v445 = vpop.f32.mrb[0].mxu0
  %v446 = vadd.f32 %v90, %v445
  %v447 = vpop.f32.mrb[0].mxu0
  %448 = vmatprep.mubr.f32.mxu0 0.0
  %449 = vmatmul.mubr.f32.gmra.mrb[0].mxu0 %v130
  %v450 = vpop.f32.mrb[0].mxu0
  %v451 = vadd.f32 %v95, %v450
  %v452 = vpop.f32.mrb[0].mxu0
  %453 = vmatprep.mubr.f32.mxu0 0.0
  %454 = vmatmul.mubr.f32.gmra.mrb[0].mxu0 %v133
  %v455 = vpop.f32.mrb[0].mxu0
  %v456 = vadd.f32 %v100, %v455
  %v457 = vpop.f32.mrb[0].mxu0
  %458 = vmatprep.mubr.f32.mxu0 0.0
  %459 = vmatmul.mubr.f32.gmra.mrb[0].mxu0 %v136
  %v460 = vpop.f32.mrb[0].mxu0
  %v461 = vadd.f32 %v105, %v460
  %v462 = vpop.f32.mrb[0].mxu0
  %463 = vmatprep.mubr.f32.mxu0 0.0
  %464 = vmatmul.mubr.f32.gmra.mrb[0].mxu0 %v139
  %v465 = vpop.f32.mrb[0].mxu0
  %v466 = vadd.f32 %v110, %v465
  %v467 = vpop.f32.mrb[0].mxu0
  %468 = vmatprep.mubr.f32.mxu0 0.0
  %469 = vmatmul.mubr.f32.gmra.mrb[0].mxu0 %v142
  %v470 = vpop.f32.mrb[0].mxu0
  %v471 = vadd.f32 %v115, %v470
  %v472 = vpop.f32.mrb[0].mxu0
  %473 = vmatprep.mubr.f32.mxu0 0.0
  %474 = vmatmul.mubr.f32.gmra.mrb[0].mxu0 %v145
  %v475 = vpop.f32.mrb[0].mxu0
  %v476 = vadd.f32 %v120, %v475
  %v477 = vpop.f32.mrb[0].mxu0
  %478 = vdwg.mxu0
  %v479 = vtanh.pop %v328
  %v480 = vtanh.pop %v330
  %v481 = vtanh.pop %v441
  %v482 = vtanh.pop %v334
  %v483 = vtanh.pop %v336
  %v484 = vtanh.pop %v446
  %v485 = vtanh.pop %v340
  %v486 = vtanh.pop %v342
  %v487 = vtanh.pop %v451
  %v488 = vtanh.pop %v346
  %v489 = vtanh.pop %v348
  %v490 = vtanh.pop %v456
  %v491 = vtanh.pop %v352
  %v492 = vtanh.pop %v354
  %v493 = vtanh.pop %v461
  %v494 = vtanh.pop %v358
  %v495 = vtanh.pop %v360
  %v496 = vtanh.pop %v466
  %v497 = vtanh.pop %v364
  %v498 = vtanh.pop %v366
  %v499 = vtanh.pop %v471
  %v500 = vtanh.pop %v370
  %v501 = vtanh.pop %v372
  %v502 = vtanh.pop %v476
  %v503 = vld [vmem:[%s3] sm:$0xff]
  %v504 = vld [vmem:[%s3 + $0x8] sm:$0xff]
  %v505 = vld [vmem:[%s3 + $0x10] sm:$0xff]
  %v506 = vld [vmem:[%s3 + $0x18] sm:$0xff]
  %v507 = vld [vmem:[%s3 + $0x20] sm:$0xff]
  %v508 = vld [vmem:[%s3 + $0x28] sm:$0xff]
  %v509 = vld [vmem:[%s3 + $0x30] sm:$0xff]
  %v510 = vld [vmem:[%s3 + $0x38] sm:$0xff]
  %v511 = vld [vmem:[%s4] sm:$0xff]
  %v512 = vld [vmem:[%s4 + $0x8] sm:$0xff]
  %v513 = vld [vmem:[%s4 + $0x10] sm:$0xff]
  %v514 = vld [vmem:[%s4 + $0x18] sm:$0xff]
  %v515 = vld [vmem:[%s4 + $0x20] sm:$0xff]
  %v516 = vld [vmem:[%s4 + $0x28] sm:$0xff]
  %v517 = vld [vmem:[%s4 + $0x30] sm:$0xff]
  %v518 = vld [vmem:[%s4 + $0x38] sm:$0xff]
  %520 = vset.pattern.permute.xlu0 0
  %521 = vperm.xlu0 %520, %v511
  %v522 = vpop.permute.xlu0 %521
  %525 = vset.pattern.permute.xlu0 0
  %526 = vperm.xlu0 %525, %v512
  %v527 = vpop.permute.xlu0 %526
  %530 = vset.pattern.permute.xlu0 0
  %531 = vperm.xlu0 %530, %v513
  %v532 = vpop.permute.xlu0 %531
  %535 = vset.pattern.permute.xlu0 0
  %536 = vperm.xlu0 %535, %v514
  %v537 = vpop.permute.xlu0 %536
  %540 = vset.pattern.permute.xlu0 0
  %541 = vperm.xlu0 %540, %v515
  %v542 = vpop.permute.xlu0 %541
  %545 = vset.pattern.permute.xlu0 0
  %546 = vperm.xlu0 %545, %v516
  %v547 = vpop.permute.xlu0 %546
  %550 = vset.pattern.permute.xlu0 0
  %551 = vperm.xlu0 %550, %v517
  %v552 = vpop.permute.xlu0 %551
  %555 = vset.pattern.permute.xlu0 0
  %556 = vperm.xlu0 %555, %v518
  %v557 = vpop.permute.xlu0 %556
  %vm559 = vcmask 523264
  %v561 = vsel %vm559, %v503, 0
  %v564 = vsel %vm559, %v504, 0
  %v567 = vsel %vm559, %v505, 0
  %v570 = vsel %vm559, %v506, 0
  %v573 = vsel %vm559, %v507, 0
  %v576 = vsel %vm559, %v508, 0
  %v579 = vsel %vm559, %v509, 0
  %v582 = vsel %vm559, %v510, 0
  %584 = vmatprep.subr.mxu0 %v480
  %585 = vmatpush1.msra.mxu0 %v479
  %586 = vmatprep.subr.mxu0 %v483
  %587 = vmatpush1.msra.mxu0 %v482
  %588 = vmatprep.subr.mxu0 %v486
  %589 = vmatpush1.msra.mxu0 %v485
  %590 = vmatprep.subr.mxu0 %v489
  %591 = vmatpush1.msra.mxu0 %v488
  %592 = vmatprep.subr.mxu0 %v492
  %593 = vmatpush1.msra.mxu0 %v491
  %594 = vmatprep.subr.mxu0 %v495
  %595 = vmatpush1.msra.mxu0 %v494
  %596 = vmatprep.subr.mxu0 %v498
  %597 = vmatpush1.msra.mxu0 %v497
  %598 = vmatprep.subr.mxu0 %v501
  %599 = vmatpush1.msra.mxu0 %v500
  %600 = vmatprep.subr.mxu0 0.0
  %601 = vmatpush1.msra.mxu0 0.0
  %602 = vmatprep.subr.mxu0 0.0
  %603 = vmatpush1.msra.mxu0 0.0
  %604 = vmatprep.subr.mxu0 0.0
  %605 = vmatpush1.msra.mxu0 0.0
  %606 = vmatprep.subr.mxu0 0.0
  %607 = vmatpush1.msra.mxu0 0.0
  %608 = vmatprep.subr.mxu0 0.0
  %609 = vmatpush1.msra.mxu0 0.0
  %610 = vmatprep.subr.mxu0 0.0
  %611 = vmatpush1.msra.mxu0 0.0
  %612 = vmatprep.subr.mxu0 0.0
  %613 = vmatpush1.msra.mxu0 0.0
  %614 = vmatprep.subr.mxu0 0.0
  %615 = vmatpush1.msra.mxu0 0.0
  %616 = vmatprep.subr.mxu0 0.0
  %617 = vmatpush1.msra.mxu0 0.0
  %618 = vmatprep.subr.mxu0 0.0
  %619 = vmatpush1.msra.mxu0 0.0
  %620 = vmatprep.subr.mxu0 0.0
  %621 = vmatpush1.msra.mxu0 0.0
  %622 = vmatprep.subr.mxu0 0.0
  %623 = vmatpush1.msra.mxu0 0.0
  %624 = vmatprep.subr.mxu0 0.0
  %625 = vmatpush1.msra.mxu0 0.0
  %626 = vmatprep.subr.mxu0 0.0
  %627 = vmatpush1.msra.mxu0 0.0
  %628 = vmatprep.subr.mxu0 0.0
  %629 = vmatpush1.msra.mxu0 0.0
  %630 = vmatprep.subr.mxu0 0.0
  %631 = vmatpush1.msra.mxu0 0.0
  %632 = vmatprep.subr.mxu0 0.0
  %633 = vmatpush1.msra.mxu0 0.0
  %634 = vmatprep.subr.mxu0 0.0
  %635 = vmatpush1.msra.mxu0 0.0
  %636 = vmatprep.subr.mxu0 0.0
  %637 = vmatpush1.msra.mxu0 0.0
  %638 = vmatprep.subr.mxu0 0.0
  %639 = vmatpush1.msra.mxu0 0.0
  %640 = vmatprep.subr.mxu0 0.0
  %641 = vmatpush1.msra.mxu0 0.0
  %642 = vmatprep.subr.mxu0 0.0
  %643 = vmatpush1.msra.mxu0 0.0
  %644 = vmatprep.subr.mxu0 0.0
  %645 = vmatpush1.msra.mxu0 0.0
  %646 = vmatprep.subr.mxu0 0.0
  %647 = vmatpush1.msra.mxu0 0.0
  %648 = vmatprep.mubr.f32.mxu0 0.0
  %649 = vmatmul.mubr.f32.gmra.mrb[0].mxu0 %v561
  %v650 = vpop.f32.mrb[0].mxu0
  %v651 = vadd.f32 %v522, %v650
  %v652 = vpop.f32.mrb[0].mxu0
  %v653 = vadd.f32 %v522, %v652
  %654 = vmatprep.mubr.f32.mxu0 0.0
  %655 = vmatmul.mubr.f32.gmra.mrb[0].mxu0 %v564
  %v656 = vpop.f32.mrb[0].mxu0
  %v657 = vadd.f32 %v527, %v656
  %v658 = vpop.f32.mrb[0].mxu0
  %v659 = vadd.f32 %v527, %v658
  %660 = vmatprep.mubr.f32.mxu0 0.0
  %661 = vmatmul.mubr.f32.gmra.mrb[0].mxu0 %v567
  %v662 = vpop.f32.mrb[0].mxu0
  %v663 = vadd.f32 %v532, %v662
  %v664 = vpop.f32.mrb[0].mxu0
  %v665 = vadd.f32 %v532, %v664
  %666 = vmatprep.mubr.f32.mxu0 0.0
  %667 = vmatmul.mubr.f32.gmra.mrb[0].mxu0 %v570
  %v668 = vpop.f32.mrb[0].mxu0
  %v669 = vadd.f32 %v537, %v668
  %v670 = vpop.f32.mrb[0].mxu0
  %v671 = vadd.f32 %v537, %v670
  %672 = vmatprep.mubr.f32.mxu0 0.0
  %673 = vmatmul.mubr.f32.gmra.mrb[0].mxu0 %v573
  %v674 = vpop.f32.mrb[0].mxu0
  %v675 = vadd.f32 %v542, %v674
  %v676 = vpop.f32.mrb[0].mxu0
  %v677 = vadd.f32 %v542, %v676
  %678 = vmatprep.mubr.f32.mxu0 0.0
  %679 = vmatmul.mubr.f32.gmra.mrb[0].mxu0 %v576
  %v680 = vpop.f32.mrb[0].mxu0
  %v681 = vadd.f32 %v547, %v680
  %v682 = vpop.f32.mrb[0].mxu0
  %v683 = vadd.f32 %v547, %v682
  %684 = vmatprep.mubr.f32.mxu0 0.0
  %685 = vmatmul.mubr.f32.gmra.mrb[0].mxu0 %v579
  %v686 = vpop.f32.mrb[0].mxu0
  %v687 = vadd.f32 %v552, %v686
  %v688 = vpop.f32.mrb[0].mxu0
  %v689 = vadd.f32 %v552, %v688
  %690 = vmatprep.mubr.f32.mxu0 0.0
  %691 = vmatmul.mubr.f32.gmra.mrb[0].mxu0 %v582
  %v692 = vpop.f32.mrb[0].mxu0
  %v693 = vadd.f32 %v557, %v692
  %v694 = vpop.f32.mrb[0].mxu0
  %v695 = vadd.f32 %v557, %v694
  %696 = vdwg.mxu0
  %697 = vmatprep.subr.mxu0 0.0
  %698 = vmatpush1.msra.mxu0 %v481
  %699 = vmatprep.subr.mxu0 0.0
  %700 = vmatpush1.msra.mxu0 %v484
  %701 = vmatprep.subr.mxu0 0.0
  %702 = vmatpush1.msra.mxu0 %v487
  %703 = vmatprep.subr.mxu0 0.0
  %704 = vmatpush1.msra.mxu0 %v490
  %705 = vmatprep.subr.mxu0 0.0
  %706 = vmatpush1.msra.mxu0 %v493
  %707 = vmatprep.subr.mxu0 0.0
  %708 = vmatpush1.msra.mxu0 %v496
  %709 = vmatprep.subr.mxu0 0.0
  %710 = vmatpush1.msra.mxu0 %v499
  %711 = vmatprep.subr.mxu0 0.0
  %712 = vmatpush1.msra.mxu0 %v502
  %713 = vmatprep.subr.mxu0 0.0
  %714 = vmatpush1.msra.mxu0 0.0
  %715 = vmatprep.subr.mxu0 0.0
  %716 = vmatpush1.msra.mxu0 0.0
  %717 = vmatprep.subr.mxu0 0.0
  %718 = vmatpush1.msra.mxu0 0.0
  %719 = vmatprep.subr.mxu0 0.0
  %720 = vmatpush1.msra.mxu0 0.0
  %721 = vmatprep.subr.mxu0 0.0
  %722 = vmatpush1.msra.mxu0 0.0
  %723 = vmatprep.subr.mxu0 0.0
  %724 = vmatpush1.msra.mxu0 0.0
  %725 = vmatprep.subr.mxu0 0.0
  %726 = vmatpush1.msra.mxu0 0.0
  %727 = vmatprep.subr.mxu0 0.0
  %728 = vmatpush1.msra.mxu0 0.0
  %729 = vmatprep.subr.mxu0 0.0
  %730 = vmatpush1.msra.mxu0 0.0
  %731 = vmatprep.subr.mxu0 0.0
  %732 = vmatpush1.msra.mxu0 0.0
  %733 = vmatprep.subr.mxu0 0.0
  %734 = vmatpush1.msra.mxu0 0.0
  %735 = vmatprep.subr.mxu0 0.0
  %736 = vmatpush1.msra.mxu0 0.0
  %737 = vmatprep.subr.mxu0 0.0
  %738 = vmatpush1.msra.mxu0 0.0
  %739 = vmatprep.subr.mxu0 0.0
  %740 = vmatpush1.msra.mxu0 0.0
  %741 = vmatprep.subr.mxu0 0.0
  %742 = vmatpush1.msra.mxu0 0.0
  %743 = vmatprep.subr.mxu0 0.0
  %744 = vmatpush1.msra.mxu0 0.0
  %745 = vmatprep.subr.mxu0 0.0
  %746 = vmatpush1.msra.mxu0 0.0
  %747 = vmatprep.subr.mxu0 0.0
  %748 = vmatpush1.msra.mxu0 0.0
  %749 = vmatprep.subr.mxu0 0.0
  %750 = vmatpush1.msra.mxu0 0.0
  %751 = vmatprep.subr.mxu0 0.0
  %752 = vmatpush1.msra.mxu0 0.0
  %753 = vmatprep.subr.mxu0 0.0
  %754 = vmatpush1.msra.mxu0 0.0
  %755 = vmatprep.subr.mxu0 0.0
  %756 = vmatpush1.msra.mxu0 0.0
  %757 = vmatprep.subr.mxu0 0.0
  %758 = vmatpush1.msra.mxu0 0.0
  %759 = vmatprep.subr.mxu0 0.0
  %760 = vmatpush1.msra.mxu0 0.0
  %761 = vmatprep.mubr.f32.mxu0 0.0
  %762 = vmatmul.mubr.f32.gmra.mrb[0].mxu0 %v561
  %v763 = vpop.f32.mrb[0].mxu0
  %v764 = vadd.f32 %v522, %v763
  %v765 = vpop.f32.mrb[0].mxu0
  %766 = vmatprep.mubr.f32.mxu0 0.0
  %767 = vmatmul.mubr.f32.gmra.mrb[0].mxu0 %v564
  %v768 = vpop.f32.mrb[0].mxu0
  %v769 = vadd.f32 %v527, %v768
  %v770 = vpop.f32.mrb[0].mxu0
  %771 = vmatprep.mubr.f32.mxu0 0.0
  %772 = vmatmul.mubr.f32.gmra.mrb[0].mxu0 %v567
  %v773 = vpop.f32.mrb[0].mxu0
  %v774 = vadd.f32 %v532, %v773
  %v775 = vpop.f32.mrb[0].mxu0
  %776 = vmatprep.mubr.f32.mxu0 0.0
  %777 = vmatmul.mubr.f32.gmra.mrb[0].mxu0 %v570
  %v778 = vpop.f32.mrb[0].mxu0
  %v779 = vadd.f32 %v537, %v778
  %v780 = vpop.f32.mrb[0].mxu0
  %781 = vmatprep.mubr.f32.mxu0 0.0
  %782 = vmatmul.mubr.f32.gmra.mrb[0].mxu0 %v573
  %v783 = vpop.f32.mrb[0].mxu0
  %v784 = vadd.f32 %v542, %v783
  %v785 = vpop.f32.mrb[0].mxu0
  %786 = vmatprep.mubr.f32.mxu0 0.0
  %787 = vmatmul.mubr.f32.gmra.mrb[0].mxu0 %v576
  %v788 = vpop.f32.mrb[0].mxu0
  %v789 = vadd.f32 %v547, %v788
  %v790 = vpop.f32.mrb[0].mxu0
  %791 = vmatprep.mubr.f32.mxu0 0.0
  %792 = vmatmul.mubr.f32.gmra.mrb[0].mxu0 %v579
  %v793 = vpop.f32.mrb[0].mxu0
  %v794 = vadd.f32 %v552, %v793
  %v795 = vpop.f32.mrb[0].mxu0
  %796 = vmatprep.mubr.f32.mxu0 0.0
  %797 = vmatmul.mubr.f32.gmra.mrb[0].mxu0 %v582
  %v798 = vpop.f32.mrb[0].mxu0
  %v799 = vadd.f32 %v557, %v798
  %v800 = vpop.f32.mrb[0].mxu0
  %801 = vdwg.mxu0
  %v802 = vtanh.pop %v651
  %v803 = vtanh.pop %v653
  %v804 = vtanh.pop %v764
  %v805 = vtanh.pop %v657
  %v806 = vtanh.pop %v659
  %v807 = vtanh.pop %v769
  %v808 = vtanh.pop %v663
  %v809 = vtanh.pop %v665
  %v810 = vtanh.pop %v774
  %v811 = vtanh.pop %v669
  %v812 = vtanh.pop %v671
  %v813 = vtanh.pop %v779
  %v814 = vtanh.pop %v675
  %v815 = vtanh.pop %v677
  %v816 = vtanh.pop %v784
  %v817 = vtanh.pop %v681
  %v818 = vtanh.pop %v683
  %v819 = vtanh.pop %v789
  %v820 = vtanh.pop %v687
  %v821 = vtanh.pop %v689
  %v822 = vtanh.pop %v794
  %v823 = vtanh.pop %v693
  %v824 = vtanh.pop %v695
  %v825 = vtanh.pop %v799
  %v826 = vld [vmem:[%s5] sm:$0x1]
  %v827 = vld [vmem:[#allocation2] sm:$0x1]
  %829 = vset.pattern.permute.xlu0 0
  %830 = vperm.xlu0 %829, %v827
  %v831 = vpop.permute.xlu0 %830
  %v833 = vlaneseq
  %v834 = vshrl.u32 %v833, 7
  %v835 = vsub.s32 0, %v834
  %v836 = vrot.slane %v831, %v835
  %v838 = vsel %vm559, %v826, 0
  %840 = vmatprep.subr.mxu0 %v803
  %841 = vmatpush1.msra.mxu0 %v802
  %842 = vmatprep.subr.mxu0 %v806
  %843 = vmatpush1.msra.mxu0 %v805
  %844 = vmatprep.subr.mxu0 %v809
  %845 = vmatpush1.msra.mxu0 %v808
  %846 = vmatprep.subr.mxu0 %v812
  %847 = vmatpush1.msra.mxu0 %v811
  %848 = vmatprep.subr.mxu0 %v815
  %849 = vmatpush1.msra.mxu0 %v814
  %850 = vmatprep.subr.mxu0 %v818
  %851 = vmatpush1.msra.mxu0 %v817
  %852 = vmatprep.subr.mxu0 %v821
  %853 = vmatpush1.msra.mxu0 %v820
  %854 = vmatprep.subr.mxu0 %v824
  %855 = vmatpush1.msra.mxu0 %v823
  %856 = vmatprep.subr.mxu0 0.0
  %857 = vmatpush1.msra.mxu0 0.0
  %858 = vmatprep.subr.mxu0 0.0
  %859 = vmatpush1.msra.mxu0 0.0
  %860 = vmatprep.subr.mxu0 0.0
  %861 = vmatpush1.msra.mxu0 0.0
  %862 = vmatprep.subr.mxu0 0.0
  %863 = vmatpush1.msra.mxu0 0.0
  %864 = vmatprep.subr.mxu0 0.0
  %865 = vmatpush1.msra.mxu0 0.0
  %866 = vmatprep.subr.mxu0 0.0
  %867 = vmatpush1.msra.mxu0 0.0
  %868 = vmatprep.subr.mxu0 0.0
  %869 = vmatpush1.msra.mxu0 0.0
  %870 = vmatprep.subr.mxu0 0.0
  %871 = vmatpush1.msra.mxu0 0.0
  %872 = vmatprep.subr.mxu0 0.0
  %873 = vmatpush1.msra.mxu0 0.0
  %874 = vmatprep.subr.mxu0 0.0
  %875 = vmatpush1.msra.mxu0 0.0
  %876 = vmatprep.subr.mxu0 0.0
  %877 = vmatpush1.msra.mxu0 0.0
  %878 = vmatprep.subr.mxu0 0.0
  %879 = vmatpush1.msra.mxu0 0.0
  %880 = vmatprep.subr.mxu0 0.0
  %881 = vmatpush1.msra.mxu0 0.0
  %882 = vmatprep.subr.mxu0 0.0
  %883 = vmatpush1.msra.mxu0 0.0
  %884 = vmatprep.subr.mxu0 0.0
  %885 = vmatpush1.msra.mxu0 0.0
  %886 = vmatprep.subr.mxu0 0.0
  %887 = vmatpush1.msra.mxu0 0.0
  %888 = vmatprep.subr.mxu0 0.0
  %889 = vmatpush1.msra.mxu0 0.0
  %890 = vmatprep.subr.mxu0 0.0
  %891 = vmatpush1.msra.mxu0 0.0
  %892 = vmatprep.subr.mxu0 0.0
  %893 = vmatpush1.msra.mxu0 0.0
  %894 = vmatprep.subr.mxu0 0.0
  %895 = vmatpush1.msra.mxu0 0.0
  %896 = vmatprep.subr.mxu0 0.0
  %897 = vmatpush1.msra.mxu0 0.0
  %898 = vmatprep.subr.mxu0 0.0
  %899 = vmatpush1.msra.mxu0 0.0
  %900 = vmatprep.subr.mxu0 0.0
  %901 = vmatpush1.msra.mxu0 0.0
  %902 = vmatprep.subr.mxu0 0.0
  %903 = vmatpush1.msra.mxu0 0.0
  %904 = vmatprep.mubr.f32.mxu0 0.0
  %905 = vmatmul.mubr.f32.gmra.mrb[0].mxu0 %v838
  %v906 = vpop.f32.mrb[0].mxu0
  %v907 = vadd.f32 %v836, %v906
  %v908 = vpop.f32.mrb[0].mxu0
  %v909 = vadd.f32 %v836, %v908
  %910 = vdwg.mxu0
  %911 = vmatprep.subr.mxu0 0.0
  %912 = vmatpush1.msra.mxu0 %v804
  %913 = vmatprep.subr.mxu0 0.0
  %914 = vmatpush1.msra.mxu0 %v807
  %915 = vmatprep.subr.mxu0 0.0
  %916 = vmatpush1.msra.mxu0 %v810
  %917 = vmatprep.subr.mxu0 0.0
  %918 = vmatpush1.msra.mxu0 %v813
  %919 = vmatprep.subr.mxu0 0.0
  %920 = vmatpush1.msra.mxu0 %v816
  %921 = vmatprep.subr.mxu0 0.0
  %922 = vmatpush1.msra.mxu0 %v819
  %923 = vmatprep.subr.mxu0 0.0
  %924 = vmatpush1.msra.mxu0 %v822
  %925 = vmatprep.subr.mxu0 0.0
  %926 = vmatpush1.msra.mxu0 %v825
  %927 = vmatprep.subr.mxu0 0.0
  %928 = vmatpush1.msra.mxu0 0.0
  %929 = vmatprep.subr.mxu0 0.0
  %930 = vmatpush1.msra.mxu0 0.0
  %931 = vmatprep.subr.mxu0 0.0
  %932 = vmatpush1.msra.mxu0 0.0
  %933 = vmatprep.subr.mxu0 0.0
  %934 = vmatpush1.msra.mxu0 0.0
  %935 = vmatprep.subr.mxu0 0.0
  %936 = vmatpush1.msra.mxu0 0.0
  %937 = vmatprep.subr.mxu0 0.0
  %938 = vmatpush1.msra.mxu0 0.0
  %939 = vmatprep.subr.mxu0 0.0
  %940 = vmatpush1.msra.mxu0 0.0
  %941 = vmatprep.subr.mxu0 0.0
  %942 = vmatpush1.msra.mxu0 0.0
  %943 = vmatprep.subr.mxu0 0.0
  %944 = vmatpush1.msra.mxu0 0.0
  %945 = vmatprep.subr.mxu0 0.0
  %946 = vmatpush1.msra.mxu0 0.0
  %947 = vmatprep.subr.mxu0 0.0
  %948 = vmatpush1.msra.mxu0 0.0
  %949 = vmatprep.subr.mxu0 0.0
  %950 = vmatpush1.msra.mxu0 0.0
  %951 = vmatprep.subr.mxu0 0.0
  %952 = vmatpush1.msra.mxu0 0.0
  %953 = vmatprep.subr.mxu0 0.0
  %954 = vmatpush1.msra.mxu0 0.0
  %955 = vmatprep.subr.mxu0 0.0
  %956 = vmatpush1.msra.mxu0 0.0
  %957 = vmatprep.subr.mxu0 0.0
  %958 = vmatpush1.msra.mxu0 0.0
  %959 = vmatprep.subr.mxu0 0.0
  %960 = vmatpush1.msra.mxu0 0.0
  %961 = vmatprep.subr.mxu0 0.0
  %962 = vmatpush1.msra.mxu0 0.0
  %963 = vmatprep.subr.mxu0 0.0
  %964 = vmatpush1.msra.mxu0 0.0
  %965 = vmatprep.subr.mxu0 0.0
  %966 = vmatpush1.msra.mxu0 0.0
  %967 = vmatprep.subr.mxu0 0.0
  %968 = vmatpush1.msra.mxu0 0.0
  %969 = vmatprep.subr.mxu0 0.0
  %970 = vmatpush1.msra.mxu0 0.0
  %971 = vmatprep.subr.mxu0 0.0
  %972 = vmatpush1.msra.mxu0 0.0
  %973 = vmatprep.subr.mxu0 0.0
  %974 = vmatpush1.msra.mxu0 0.0
  %975 = vmatprep.mubr.f32.mxu0 0.0
  %976 = vmatmul.mubr.f32.gmra.mrb[0].mxu0 %v838
  %v977 = vpop.f32.mrb[0].mxu0
  %v978 = vadd.f32 %v836, %v977
  %v979 = vpop.f32.mrb[0].mxu0
  %980 = vdwg.mxu0
  %v984 = vcombine.low %v907, %v909
  %v986 = vunpack.c.l.s4 1966171168
  %v987 = vunpack.c.0.s8 %v986
  %v988 = vlaneseq
  %v989 = vshrl.u32 %v988, 7
  %v990 = vsub.s32 %v987, %v989
  %v991 = vrot.slane %v984, %v990
  %v993 = vunpack.c.l.s4 1966171168
  %v994 = vunpack.c.0.s8 %v993
  %v995 = vlaneseq
  %v996 = vshrl.u32 %v995, 7
  %v997 = vsub.s32 %v994, %v996
  %v998 = vrot.slane %v978, %v997
  %v999 = vcombine.low %v991, %v998
  %v1001 = vunpack.c.l.s4 1966171168
  %v1002 = vunpack.c.0.s8 %v1001
  %v1003 = vlaneseq
  %v1004 = vshrl.u32 %v1003, 7
  %v1005 = vsub.s32 %v1002, %v1004
  %v1006 = vrot.slane %v999, %v1005
  %v1008 = vlaneseq
  %vm1009 = vcmp.ge.s32.totalorder %v1008, 0
  %vm1010 = vcmp.lt.s32.totalorder %v1008, 300
  %vm1011 = vmand %vm1009, %vm1010
  %1012 = vst.msk [vmem:[%s7] sm:$0x7] %vm1011, %v1006
  // Predicated region
  $region30: #{mlp_critic_forward.1} parent=0 // pred_check
    _
  $region31: #{mlp_critic_forward.1} parent=0 // pred_check_branch
    %1014 = sbr.rel (0) target = $region33
  $region32: #{mlp_critic_forward.1} parent=0 // pred_region
    _
  $region33: #{mlp_critic_forward.1} parent=0 // pred_fallthru
    _
  // Predicated region
  $region34: #{mlp_critic_forward.1} parent=0 // pred_check
    _
  $region35: #{mlp_critic_forward.1} parent=0 // pred_check_branch
    %1016 = sbr.rel (0) target = $region37
  $region36: #{mlp_critic_forward.1} parent=0 // pred_region
    _
  $region37: #{mlp_critic_forward.1} parent=0 // pred_fallthru
    _

</llo_original>
